<compile_context>
chip_gen: v7x
topology: tpu7x:2x2x1
jax: 0.10.0
libtpu: 0.0.40
codegen_flags: <defaults>
</compile_context>

<pallas_src>
import functools

import jax
import jax.numpy as jnp
from jax.experimental import pallas as pl
from jax.experimental.pallas import tpu as pltpu


def _spec_normalize_kernel(x_ref, o_ref, *, eps: float):
    # x_ref / o_ref: (R, H*W) block; each row is one (batch, channel) slice.
    x = x_ref[...]
    xf = x.astype(jnp.float32)

    # Per-row (per (b, c) slice) min / max over the flattened (H, W) dims.
    min_ = jnp.min(xf, axis=-1, keepdims=True)   # (R, 1) f32
    max_ = jnp.max(xf, axis=-1, keepdims=True)   # (R, 1) f32

    # One exact reciprocal per row (f32, so eps=1e-8 is meaningful), then a
    # broadcasted subtract + multiply on the VPU.
    inv = 1.0 / (max_ - min_ + eps)              # (R, 1) f32, exact

    if x.dtype == jnp.bfloat16:
        # bf16 VALU path (v6e/v7x): keep the full-tile elementwise ops in bf16.
        o_ref[...] = ((x - min_.astype(x.dtype)) * inv.astype(x.dtype)).astype(
            o_ref.dtype
        )
    else:
        o_ref[...] = ((xf - min_) * inv).astype(o_ref.dtype)


def spec_normalize(
    x: jax.Array,
    eps: float = 1e-8,
    target_block_bytes: int = 2 * 1024 * 1024,
) -> jax.Array:
    """Pallas implementation of SpecNormalize.forward.

    Args:
      x: array of shape (B, C, H, W), NCHW layout.
      eps: numerical epsilon (default 1e-8, matching the PyTorch module).
      target_block_bytes: approximate per-buffer VMEM tile size.

    Returns:
      Array of same shape/dtype as x, normalized per (B, C) slice.
    """
    B, C, H, W = x.shape
    rows = B * C
    cols = H * W

    # Free, contiguous metadata reshape for NCHW: each row is one (b, c) slice.
    x2d = x.reshape(rows, cols)

    bytes_per_row = cols * x2d.dtype.itemsize
    r = max(1, target_block_bytes // bytes_per_row)
    r = max(8, (r // 8) * 8)          # row-block must be a multiple of 8 sublanes
    if r >= rows:
        r = rows                       # full extent is always a legal block dim
        # v7x has 2 TensorCores; give the parallel grid axis >= 2 steps when
        # the problem is big enough so both cores get a share of rows.
        if rows >= 16:
            r = max(8, ((rows // 2) // 8) * 8)

    grid = (pl.cdiv(rows, r),)

    kernel = functools.partial(_spec_normalize_kernel, eps=eps)

    out2d = pl.pallas_call(
        kernel,
        out_shape=jax.ShapeDtypeStruct((rows, cols), x.dtype),
        grid_spec=pltpu.PrefetchScalarGridSpec(
            num_scalar_prefetch=0,
            grid=grid,
            in_specs=[pl.BlockSpec((r, cols), lambda i: (i, 0))],
            out_specs=pl.BlockSpec((r, cols), lambda i: (i, 0)),
        ),
        compiler_params=pltpu.CompilerParams(
            dimension_semantics=("parallel",),
        ),
    )(x2d)

    return out2d.reshape(B, C, H, W)


def _reference(x: jnp.ndarray, eps: float = 1e-8) -> jnp.ndarray:
    min_ = jnp.min(jnp.min(x, axis=-1, keepdims=True), axis=-2, keepdims=True)
    max_ = jnp.max(jnp.max(x, axis=-1, keepdims=True), axis=-2, keepdims=True)
    return (x - min_) / (max_ - min_ + eps)


if __name__ == "__main__":
    key = jax.random.PRNGKey(0)
    B, C, H, W = 2, 4, 16, 16
    x = jax.random.normal(key, (B, C, H, W), dtype=jnp.float32)

    out = jax.block_until_ready(spec_normalize(x))
    ref = _reference(x)
    assert out.shape == ref.shape and out.dtype == ref.dtype
    assert jnp.allclose(out, ref, atol=1e-5, rtol=1e-5), "mismatch vs reference"

    # Exercise the multi-block + partial-last-block path (rows=12, R=8).
    x2 = jax.random.normal(jax.random.PRNGKey(1), (3, 4, 16, 16), dtype=jnp.float32)
    out2 = jax.block_until_ready(spec_normalize(x2, target_block_bytes=8 * 1024))
    ref2 = _reference(x2)
    assert jnp.allclose(out2, ref2, atol=1e-5, rtol=1e-5), "mismatch (partial block)"

    print("KERNEL_OK")
</pallas_src>

<mosaic_0001>
module attributes {stable_mosaic.version = 11 : i64} {
  func.func @_spec_normalize_kernel(%arg0: i32, %arg1: memref<8x256xf32, #tpu.memory_space<vmem>>, %arg2: memref<8x256xf32, #tpu.memory_space<vmem>>) attributes {dimension_semantics = [#tpu.dimension_semantics<parallel>], iteration_bounds = array<i64: 1>, scalar_prefetch = 0 : i64, scratch_operands = 0 : i64, tpu.core_type = #tpu.core_type<tc>, window_params = [{transform_indices = @transform_0, window_bounds = array<i64: 8, 256>}, {transform_indices = @transform_1, window_bounds = array<i64: 8, 256>}]} {
    %c0 = arith.constant 0 : index
    %c0_0 = arith.constant 0 : index
    %0 = vector.load %arg1[%c0, %c0_0] : memref<8x256xf32, #tpu.memory_space<vmem>>, vector<8x256xf32>
    %cst = arith.constant dense<0x7F800000> : vector<8xf32>
    %1 = vector.multi_reduction <minimumf>, %0, %cst [1] : vector<8x256xf32> to vector<8xf32>
    %2 = vector.shape_cast %1 : vector<8xf32> to vector<8x1xf32>
    %cst_1 = arith.constant dense<0xFF800000> : vector<8xf32>
    %3 = vector.multi_reduction <maximumf>, %0, %cst_1 [1] : vector<8x256xf32> to vector<8xf32>
    %4 = vector.shape_cast %3 : vector<8xf32> to vector<8x1xf32>
    %5 = arith.subf %4, %2 : vector<8x1xf32>
    %cst_2 = arith.constant 9.99999993E-9 : f32
    %6 = vector.broadcast %cst_2 : f32 to vector<8x1xf32>
    %7 = arith.addf %5, %6 : vector<8x1xf32>
    %cst_3 = arith.constant 1.000000e+00 : f32
    %8 = vector.broadcast %cst_3 : f32 to vector<8x1xf32>
    %9 = arith.divf %8, %7 : vector<8x1xf32>
    %10 = vector.broadcast %2 : vector<8x1xf32> to vector<8x256xf32>
    %11 = arith.subf %0, %10 : vector<8x256xf32>
    %12 = vector.broadcast %9 : vector<8x1xf32> to vector<8x256xf32>
    %13 = arith.mulf %11, %12 : vector<8x256xf32>
    %c0_4 = arith.constant 0 : index
    %c0_5 = arith.constant 0 : index
    %14 = vector.load %arg2[%c0_4, %c0_5] : memref<8x256xf32, #tpu.memory_space<vmem>>, vector<8x256xf32>
    tpu.vector_store %arg2[%c0_4, %c0_5], %13 {strides = array<i32>} : memref<8x256xf32, #tpu.memory_space<vmem>>, vector<8x256xf32>,
    return
  }
  func.func @transform_0(%arg0: i32) -> (i32, i32) {
    %c0_i32 = arith.constant 0 : i32
    %c0_i32_0 = arith.constant 0 : i32
    return %arg0, %c0_i32 : i32, i32
  }
  func.func @transform_1(%arg0: i32) -> (i32, i32) {
    %c0_i32 = arith.constant 0 : i32
    %c0_i32_0 = arith.constant 0 : i32
    return %arg0, %c0_i32 : i32, i32
  }
}

</mosaic_0001>

<llo_original>
// kernel: tpu_custom_call.1
$region0: #{tpu_custom_call.1}
  #allocation0 [shape = 'u32[]', space=smem, size = 0x4, offset = 0x4, fixed_abs, tag = 'smem constant byte address 0x4 - core index']
  #allocation1 [shape = 'u32[144,128]{1,0:T(1,128)}', space=vmem, size = 0x12000, scoped, tag = 'internal scratch']
  %s0 = inlined_call_operand.hbm [shape: f32[8,256], index: 0, kind: input, shape index: {}]
  %s1 = inlined_call_operand.hbm [shape: f32[8,256], index: 1, kind: output, shape index: {}]
  %s2 = sld [smem:[#allocation0]]
  $region18: #{tpu_custom_call.1} parent=0
    _
  %s4 = ssub.s32 1, %s2
  %s5 = scalar_select 0, %s4, %s2
  $region1: #{tpu_custom_call.1} parent=0
    #allocation2 [shape = 'u8[8192]{0}', space=vmem, size = 0x2000, scoped, tag = 'input window, operand 0, single buffered']
    #allocation3 [shape = 's32[1]{0}', space=sflag, size = 0x4, scoped, tag = 'scoped memory for tpu_custom_call.1']
    #allocation4 [shape = 's32[1]{0}', space=sflag, size = 0x4, scoped, tag = 'scoped memory for tpu_custom_call.1']
    #allocation5 [shape = 'u8[8192]{0}', space=vmem, size = 0x2000, scoped, tag = 'output window, operand 0, single buffered']
    %6 = vsyncpa [#allocation3], 0
    %7 = vsyncpa [#allocation4], 0
    // Predicated region
    $region2: #{tpu_custom_call.1} parent=1 // pred_check
      _
    $region3: #{tpu_custom_call.1} parent=1 // pred_check_branch
      %9 = sbr.rel (0) target = $region5
    $region4: #{tpu_custom_call.1} parent=1 // pred_region
      %s11 = ssub.s32 256, 256
      %12 = vsyncadd [#allocation3], %s11
      %s14 = sshll.u32 [#allocation2], 4
      %s15 = int_to_ptr.vmem [resolvable:$true] %s14
      %17 = dma.hbm_to_vmem [thread:$0]  %s0, 256, %s15, [#allocation3]
    $region5: #{tpu_custom_call.1} parent=1 // pred_fallthru
      _
    // Predicated region
    $region6: #{tpu_custom_call.1} parent=1 // pred_check
      _
    $region7: #{tpu_custom_call.1} parent=1 // pred_check_branch
      %19 = sbr.rel (0) target = $region9
    $region8: #{tpu_custom_call.1} parent=1 // pred_region
      %20 = dma.done [#allocation3], 256
    $region9: #{tpu_custom_call.1} parent=1 // pred_fallthru
      _
    %v21 = vld [vmem:[#allocation2] sm:$0xff]
    %v22 = vld [vmem:[#allocation2 + $0x8] sm:$0xff]
    %v23 = vmin.f32 %v21, %v22
    %24 = vmin.xlane.f32.xlu0 %v23
    %v25 = vpop.xlane.xlu0 %24
    %v26 = vmax.f32 %v21, %v22
    %27 = vmax.xlane.f32.xlu0 %v26
    %v28 = vpop.xlane.xlu0 %27
    %v29 = vsub.f32 %v28, %v25
    %v30 = vadd.f32 %v29, 1e-08
    %v31 = vrcp.pop %v30
    %v32 = vmul.f32 1.0, %v31
    %v33 = vsub.f32 %v21, %v25
    %v34 = vsub.f32 %v22, %v25
    %v35 = vmul.f32 %v33, %v32
    %v36 = vmul.f32 %v34, %v32
    %37 = vst [vmem:[#allocation5] sm:$0xff] %v35
    %38 = vst [vmem:[#allocation5 + $0x8] sm:$0xff] %v36
    // Predicated region
    $region10: #{tpu_custom_call.1} parent=1 // pred_check
      _
    $region11: #{tpu_custom_call.1} parent=1 // pred_check_branch
      %40 = sbr.rel (0) target = $region13
    $region12: #{tpu_custom_call.1} parent=1 // pred_region
      %s42 = ssub.s32 256, 256
      %43 = vsyncadd [#allocation4], %s42
      %s45 = sshll.u32 [#allocation5], 4
      %s46 = int_to_ptr.vmem [resolvable:$true] %s45
      %48 = dma.vmem_to_hbm [thread:$0]  %s46, 256, %s1, [#allocation4]
    $region13: #{tpu_custom_call.1} parent=1 // pred_fallthru
      _
    // Predicated region
    $region14: #{tpu_custom_call.1} parent=1 // pred_check
      _
    $region15: #{tpu_custom_call.1} parent=1 // pred_check_branch
      %50 = sbr.rel (0) target = $region17
    $region16: #{tpu_custom_call.1} parent=1 // pred_region
      %51 = dma.done [#allocation4], 256
    $region17: #{tpu_custom_call.1} parent=1 // pred_fallthru
      _
    %52 = vsyncpa [#allocation3], 1
    %53 = vsyncpa [#allocation4], 1

</llo_original>
